<compile_context>
chip_gen: v6e
topology: v6e:2x2x1
jax: 0.10.0
libtpu: 0.0.40
codegen_flags: <defaults>
</compile_context>

<pallas_src>
import functools
import math

import jax
import jax.numpy as jnp
from jax.experimental import pallas as pl
from jax.experimental.pallas import tpu as pltpu

HP = 128  # padded hidden width (lane-dense vregs, exact MXU tile fit)
OP = 8    # padded output width (sublane-friendly; 16x less HBM writeback than 128)


def policy_net_kernel(x_ref, w1_ref, b1_ref, w2_ref, b2_ref, o_ref, *, n_valid_out):
    # Layer 1: Linear(n_in -> 128 padded) + ReLU.  Padded hidden cols are 0
    # (zero weights + zero bias -> ReLU(0) = 0), so they contribute nothing.
    x = x_ref[...]                                                     # [TB, n_in]
    h = jnp.dot(x, w1_ref[...], preferred_element_type=jnp.float32) + b1_ref[...]
    h = jnp.maximum(h, 0.0)                                            # [TB, 128]

    # Layer 2: Linear(128 -> 8 padded) + Sigmoid.  jax.nn.sigmoid lowers through
    # the EUP (logistic/tanh path) instead of an explicit full-precision divide.
    z = jnp.dot(h, w2_ref[...], preferred_element_type=jnp.float32) + b2_ref[...]
    z = jax.nn.sigmoid(z)                                              # [TB, 8]

    # Softmax over the first n_valid_out lanes.
    # NOTE: the usual max-subtraction is intentionally dropped *only* because the
    # sigmoid bounds z in (0, 1), so exp(z) < e and cannot overflow.  If the
    # activation preceding the softmax ever changes, restore the max-subtraction.
    col = jax.lax.broadcasted_iota(jnp.int32, z.shape, 1)
    e = jnp.where(col < n_valid_out, jnp.exp(z), 0.0)                  # mask 3 pad lanes
    s = jnp.sum(e, axis=-1, keepdims=True)                             # [TB, 1]
    # EUP approx reciprocal + one Newton refinement (~1e-7 rel error) instead of
    # a per-tile exact VPU divide.  Raw approx (~2e-4) would break the 1e-5 check.
    inv = pl.reciprocal(s, approx=True)
    inv = inv * (2.0 - s * inv)
    o_ref[...] = e * inv                                               # [TB, 8]


def _round_up(a, m):
    return ((a + m - 1) // m) * m


def pad_params(w1, b1, w2, b2):
    """Zero-pad parameters to lane/sublane-friendly widths.  Do this ONCE at init."""
    n_in, hidden = w1.shape
    n_out = w2.shape[1]
    assert hidden <= HP and n_out <= OP
    w1p = jnp.zeros((n_in, HP), jnp.float32).at[:, :hidden].set(w1)
    b1p = jnp.zeros((1, HP), jnp.float32).at[:, :hidden].set(b1)
    w2p = jnp.zeros((HP, OP), jnp.float32).at[:hidden, :n_out].set(w2)
    b2p = jnp.zeros((1, OP), jnp.float32).at[:, :n_out].set(b2)
    return w1p, b1p, w2p, b2p


def policy_net_forward(x, w1p, b1p, w2p, b2p, *, n_out, tb=1024, min_grid_steps=4):
    """x: [B, n_in]; padded params from pad_params(); returns [B, n_out]."""
    B, n_in = x.shape

    # Batch tile: multiple of 8 (sublane), capped at `tb`, and small enough that
    # the grid keeps >= min_grid_steps steps so the "parallel" batch axis can be
    # sharded across both v7x TensorCores and the x/out streams stay pipelined.
    TB = max(8, min(tb, _round_up(pl.cdiv(B, min_grid_steps), 8)))
    grid = pl.cdiv(B, TB)

    # Ragged edge block: the last tile may overhang B.  OOB input rows contain
    # undefined data, but every row is processed independently (no cross-row
    # reduction) and OOB output rows are dropped by the bounds-masked writeback.
    out = pl.pallas_call(
        functools.partial(policy_net_kernel, n_valid_out=n_out),
        out_shape=jax.ShapeDtypeStruct((B, OP), jnp.float32),
        grid_spec=pltpu.PrefetchScalarGridSpec(
            num_scalar_prefetch=0,
            grid=(grid,),
            in_specs=[
                pl.BlockSpec((TB, n_in), lambda i: (i, 0)),   # streamed x tiles
                pl.BlockSpec((n_in, HP), lambda i: (0, 0)),   # VMEM-resident weights
                pl.BlockSpec((1, HP), lambda i: (0, 0)),
                pl.BlockSpec((HP, OP), lambda i: (0, 0)),
                pl.BlockSpec((1, OP), lambda i: (0, 0)),
            ],
            out_specs=pl.BlockSpec((TB, OP), lambda i: (i, 0)),
        ),
        compiler_params=pltpu.CompilerParams(
            dimension_semantics=("parallel",),   # shard batch tiles across TCs (v7x)
        ),
    )(x, w1p, b1p, w2p, b2p)

    return out[:, :n_out]


def init_params(key, no_of_inputs=10, no_of_outputs=5, hidden=100):
    # PyTorch nn.Linear default init: U(-1/sqrt(fan_in), 1/sqrt(fan_in))
    k1, k2, k3, k4 = jax.random.split(key, 4)
    bound1 = 1.0 / math.sqrt(no_of_inputs)
    bound2 = 1.0 / math.sqrt(hidden)
    w1 = jax.random.uniform(k1, (no_of_inputs, hidden), jnp.float32, -bound1, bound1)
    b1 = jax.random.uniform(k2, (1, hidden), jnp.float32, -bound1, bound1)
    w2 = jax.random.uniform(k3, (hidden, no_of_outputs), jnp.float32, -bound2, bound2)
    b2 = jax.random.uniform(k4, (1, no_of_outputs), jnp.float32, -bound2, bound2)
    return w1, b1, w2, b2


if __name__ == "__main__":
    key = jax.random.PRNGKey(0)
    k_params, k_x1, k_x2 = jax.random.split(key, 3)

    no_of_inputs, no_of_outputs, hidden = 10, 5, 100
    w1, b1, w2, b2 = init_params(k_params, no_of_inputs, no_of_outputs, hidden)

    # Pad params ONCE (hoisted out of the per-forward path).
    w1p, b1p, w2p, b2p = pad_params(w1, b1, w2, b2)
    forward = jax.jit(
        functools.partial(policy_net_forward, n_out=no_of_outputs)
    )

    def reference(x):
        h = jnp.maximum(x @ w1 + b1, 0.0)
        z = jax.nn.sigmoid(h @ w2 + b2)
        return jax.nn.softmax(z, axis=-1)

    # Small shape (single grid step)
    batch = 8
    x = jax.random.normal(k_x1, (batch, no_of_inputs), jnp.float32)
    y = jax.block_until_ready(forward(x, w1p, b1p, w2p, b2p))
    assert y.shape == (batch, no_of_outputs)
    assert jnp.allclose(y, reference(x), atol=1e-5, rtol=1e-5)
    assert jnp.allclose(jnp.sum(y, axis=-1), 1.0, atol=1e-5)

    # Non-multiple batch (exercises multi-step grid + ragged edge block)
    batch2 = 250
    x2 = jax.random.normal(k_x2, (batch2, no_of_inputs), jnp.float32)
    y2 = jax.block_until_ready(forward(x2, w1p, b1p, w2p, b2p))
    assert y2.shape == (batch2, no_of_outputs)
    assert jnp.allclose(y2, reference(x2), atol=1e-5, rtol=1e-5)
    assert jnp.allclose(jnp.sum(y2, axis=-1), 1.0, atol=1e-5)

    print("KERNEL_OK")
</pallas_src>

<mosaic_0001>
module attributes {stable_mosaic.version = 11 : i64} {
  func.func @policy_net_kernel(%arg0: i32, %arg1: memref<8x10xf32, #tpu.memory_space<vmem>>, %arg2: memref<10x128xf32, #tpu.memory_space<vmem>>, %arg3: memref<1x128xf32, #tpu.memory_space<vmem>>, %arg4: memref<128x8xf32, #tpu.memory_space<vmem>>, %arg5: memref<1x8xf32, #tpu.memory_space<vmem>>, %arg6: memref<8x8xf32, #tpu.memory_space<vmem>>) attributes {dimension_semantics = [#tpu.dimension_semantics<parallel>], iteration_bounds = array<i64: 1>, scalar_prefetch = 0 : i64, scratch_operands = 0 : i64, tpu.core_type = #tpu.core_type<tc>, window_params = [{transform_indices = @transform_0, window_bounds = array<i64: 8, 10>}, {pipeline_mode = #tpu.pipeline_mode<synchronous>, transform_indices = @transform_1, window_bounds = array<i64: 10, 128>}, {pipeline_mode = #tpu.pipeline_mode<synchronous>, transform_indices = @transform_2, window_bounds = array<i64: 1, 128>}, {pipeline_mode = #tpu.pipeline_mode<synchronous>, transform_indices = @transform_3, window_bounds = array<i64: 128, 8>}, {pipeline_mode = #tpu.pipeline_mode<synchronous>, transform_indices = @transform_4, window_bounds = array<i64: 1, 8>}, {transform_indices = @transform_5, window_bounds = array<i64: 8, 8>}]} {
    %c0 = arith.constant 0 : index
    %c0_0 = arith.constant 0 : index
    %0 = vector.load %arg1[%c0, %c0_0] : memref<8x10xf32, #tpu.memory_space<vmem>>, vector<8x10xf32>
    %c0_1 = arith.constant 0 : index
    %c0_2 = arith.constant 0 : index
    %1 = vector.load %arg2[%c0_1, %c0_2] : memref<10x128xf32, #tpu.memory_space<vmem>>, vector<10x128xf32>
    %cst = arith.constant dense<0.000000e+00> : vector<8x128xf32>
    %2 = tpu.matmul %0, %1, %cst {dimension_numbers = #tpu.dot_dimension_numbers<[1], [0], [0], [1], [0, 0, 1, 1], [], []>} : vector<8x10xf32>, vector<10x128xf32>, vector<8x128xf32> -> vector<8x128xf32>
    %c0_3 = arith.constant 0 : index
    %c0_4 = arith.constant 0 : index
    %3 = vector.load %arg3[%c0_3, %c0_4] : memref<1x128xf32, #tpu.memory_space<vmem>>, vector<1x128xf32>
    %4 = vector.broadcast %3 : vector<1x128xf32> to vector<8x128xf32>
    %5 = arith.addf %2, %4 : vector<8x128xf32>
    %cst_5 = arith.constant 0.000000e+00 : f32
    %6 = vector.broadcast %cst_5 : f32 to vector<8x128xf32>
    %7 = arith.maximumf %5, %6 : vector<8x128xf32>
    %c0_6 = arith.constant 0 : index
    %c0_7 = arith.constant 0 : index
    %8 = vector.load %arg4[%c0_6, %c0_7] : memref<128x8xf32, #tpu.memory_space<vmem>>, vector<128x8xf32>
    %cst_8 = arith.constant dense<0.000000e+00> : vector<8x8xf32>
    %9 = tpu.matmul %7, %8, %cst_8 {dimension_numbers = #tpu.dot_dimension_numbers<[1], [0], [0], [1], [0, 0, 1, 1], [], []>} : vector<8x128xf32>, vector<128x8xf32>, vector<8x8xf32> -> vector<8x8xf32>
    %c0_9 = arith.constant 0 : index
    %c0_10 = arith.constant 0 : index
    %10 = vector.load %arg5[%c0_9, %c0_10] : memref<1x8xf32, #tpu.memory_space<vmem>>, vector<1x8xf32>
    %11 = vector.broadcast %10 : vector<1x8xf32> to vector<8x8xf32>
    %12 = arith.addf %9, %11 : vector<8x8xf32>
    %13 = arith.negf %12 : vector<8x8xf32>
    %14 = math.exp %13 : vector<8x8xf32>
    %cst_11 = arith.constant 1.000000e+00 : f32
    %15 = vector.broadcast %cst_11 : f32 to vector<8x8xf32>
    %16 = arith.addf %15, %14 : vector<8x8xf32>
    %17 = arith.divf %15, %16 : vector<8x8xf32>
    %18 = tpu.iota {dimensions = array<i32: 1>} : vector<8x8xi32>
    %c5_i32 = arith.constant 5 : i32
    %19 = vector.broadcast %c5_i32 : i32 to vector<8x8xi32>
    %20 = arith.cmpi slt, %18, %19 : vector<8x8xi32>
    %21 = math.exp %17 : vector<8x8xf32>
    %cst_12 = arith.constant 0.000000e+00 : f32
    %22 = vector.broadcast %cst_12 : f32 to vector<8x8xf32>
    %23 = arith.select %20, %21, %22 : vector<8x8xi1>, vector<8x8xf32>
    %cst_13 = arith.constant dense<0.000000e+00> : vector<8xf32>
    %24 = vector.multi_reduction <add>, %23, %cst_13 [1] : vector<8x8xf32> to vector<8xf32>
    %25 = vector.shape_cast %24 : vector<8xf32> to vector<8x1xf32>
    %26 = tpu.reciprocal %25 {approx = true} : vector<8x1xf32> -> vector<8x1xf32>
    %27 = arith.mulf %25, %26 : vector<8x1xf32>
    %cst_14 = arith.constant 2.000000e+00 : f32
    %28 = vector.broadcast %cst_14 : f32 to vector<8x1xf32>
    %29 = arith.subf %28, %27 : vector<8x1xf32>
    %30 = arith.mulf %26, %29 : vector<8x1xf32>
    %31 = vector.broadcast %30 : vector<8x1xf32> to vector<8x8xf32>
    %32 = arith.mulf %23, %31 : vector<8x8xf32>
    %c0_15 = arith.constant 0 : index
    %c0_16 = arith.constant 0 : index
    %33 = vector.load %arg6[%c0_15, %c0_16] : memref<8x8xf32, #tpu.memory_space<vmem>>, vector<8x8xf32>
    tpu.vector_store %arg6[%c0_15, %c0_16], %32 {strides = array<i32>} : memref<8x8xf32, #tpu.memory_space<vmem>>, vector<8x8xf32>,
    return
  }
  func.func @transform_0(%arg0: i32) -> (i32, i32) {
    %c0_i32 = arith.constant 0 : i32
    %c0_i32_0 = arith.constant 0 : i32
    return %arg0, %c0_i32 : i32, i32
  }
  func.func @transform_1(%arg0: i32) -> (i32, i32) {
    %c0_i32 = arith.constant 0 : i32
    %c0_i32_0 = arith.constant 0 : i32
    %c0_i32_1 = arith.constant 0 : i32
    return %c0_i32, %c0_i32_0 : i32, i32
  }
  func.func @transform_2(%arg0: i32) -> (i32, i32) {
    %c0_i32 = arith.constant 0 : i32
    %c0_i32_0 = arith.constant 0 : i32
    %c0_i32_1 = arith.constant 0 : i32
    return %c0_i32, %c0_i32_0 : i32, i32
  }
  func.func @transform_3(%arg0: i32) -> (i32, i32) {
    %c0_i32 = arith.constant 0 : i32
    %c0_i32_0 = arith.constant 0 : i32
    %c0_i32_1 = arith.constant 0 : i32
    return %c0_i32, %c0_i32_0 : i32, i32
  }
  func.func @transform_4(%arg0: i32) -> (i32, i32) {
    %c0_i32 = arith.constant 0 : i32
    %c0_i32_0 = arith.constant 0 : i32
    %c0_i32_1 = arith.constant 0 : i32
    return %c0_i32, %c0_i32_0 : i32, i32
  }
  func.func @transform_5(%arg0: i32) -> (i32, i32) {
    %c0_i32 = arith.constant 0 : i32
    %c0_i32_0 = arith.constant 0 : i32
    return %arg0, %c0_i32 : i32, i32
  }
}

</mosaic_0001>

<llo_original>
// kernel: policy_net_forward.1
$region0: #{policy_net_forward.1}
  #allocation0 [shape = 'u32[]', space=smem, size = 0x4, offset = 0x4, fixed_abs, tag = 'smem constant byte address 0x4 - core index']
  #allocation1 [shape = 'u32[144,128]{1,0:T(1,128)}', space=vmem, size = 0x12000, scoped, tag = 'internal scratch']
  %s0 = inlined_call_operand.vmem [shape: f32[8,10], index: 0, kind: input, shape index: {}]
  %s1 = inlined_call_operand.vmem [shape: f32[10,128], index: 1, kind: input, shape index: {}]
  %s2 = inlined_call_operand.vmem [shape: f32[1,128], index: 2, kind: input, shape index: {}]
  %s3 = inlined_call_operand.vmem [shape: f32[128,8], index: 3, kind: input, shape index: {}]
  %s4 = inlined_call_operand.vmem [shape: f32[1,8], index: 4, kind: input, shape index: {}]
  %s5 = inlined_call_operand.hbm [shape: f32[8,8], index: 5, kind: output, shape index: {}]
  %s6 = sld [smem:[#allocation0]]
  $region30: #{policy_net_forward.1} parent=0
    _
  %s8 = ssub.s32 1, %s6
  %s9 = scalar_select 0, %s8, %s6
  $region1: #{policy_net_forward.1} parent=0
    #allocation2 [shape = 'u8[4096]{0}', space=vmem, size = 0x1000, scoped, tag = 'output window, operand 0, single buffered']
    #allocation3 [shape = 's32[1]{0}', space=sflag, size = 0x4, scoped, tag = 'scoped memory for policy_net_forward.1']
    %10 = vsyncpa [#allocation3], 0
    // Predicated region
    $region2: #{policy_net_forward.1} parent=1 // pred_check
      _
    $region3: #{policy_net_forward.1} parent=1 // pred_check_branch
      %12 = sbr.rel (0) target = $region5
    $region4: #{policy_net_forward.1} parent=1 // pred_region
      _
    $region5: #{policy_net_forward.1} parent=1 // pred_fallthru
      _
    // Predicated region
    $region6: #{policy_net_forward.1} parent=1 // pred_check
      _
    $region7: #{policy_net_forward.1} parent=1 // pred_check_branch
      %14 = sbr.rel (0) target = $region9
    $region8: #{policy_net_forward.1} parent=1 // pred_region
      _
    $region9: #{policy_net_forward.1} parent=1 // pred_fallthru
      _
    // Predicated region
    $region10: #{policy_net_forward.1} parent=1 // pred_check
      _
    $region11: #{policy_net_forward.1} parent=1 // pred_check_branch
      %16 = sbr.rel (0) target = $region13
    $region12: #{policy_net_forward.1} parent=1 // pred_region
      _
    $region13: #{policy_net_forward.1} parent=1 // pred_fallthru
      _
    // Predicated region
    $region14: #{policy_net_forward.1} parent=1 // pred_check
      _
    $region15: #{policy_net_forward.1} parent=1 // pred_check_branch
      %18 = sbr.rel (0) target = $region17
    $region16: #{policy_net_forward.1} parent=1 // pred_region
      _
    $region17: #{policy_net_forward.1} parent=1 // pred_fallthru
      _
    // Predicated region
    $region18: #{policy_net_forward.1} parent=1 // pred_check
      _
    $region19: #{policy_net_forward.1} parent=1 // pred_check_branch
      %20 = sbr.rel (0) target = $region21
    $region20: #{policy_net_forward.1} parent=1 // pred_region
      _
    $region21: #{policy_net_forward.1} parent=1 // pred_fallthru
      _
    %v21 = vld [vmem:[%s0] sm:$0xff]
    %v22 = vld [vmem:[%s1] sm:$0xff]
    %v23 = vld [vmem:[%s1 + $0x8] sm:$0x3]
    %v24 = vld [vmem:[%s2] sm:$0x1]
    %v26 = vlaneseq
    %v27 = vshrl.u32 %v26, 7
    %v28 = vsub.s32 0, %v27
    %v29 = vrot.slane %v24, %v28
    %vm31 = vcmask 80896
    %v33 = vsel %vm31, %v21, 0
    %vm35 = vcmask 1041408
    %v37 = vsel %vm35, %v23, 0
    %39 = vmatprep.subr.mxu0 0.0
    %40 = vmatpush1.msra.mxu0 0.0
    %41 = vmatprep.subr.mxu0 0.0
    %42 = vmatpush1.msra.mxu0 0.0
    %43 = vmatprep.subr.mxu0 0.0
    %44 = vmatpush1.msra.mxu0 0.0
    %45 = vmatprep.subr.mxu0 0.0
    %46 = vmatpush1.msra.mxu0 0.0
    %47 = vmatprep.subr.mxu0 0.0
    %48 = vmatpush1.msra.mxu0 0.0
    %49 = vmatprep.subr.mxu0 0.0
    %50 = vmatpush1.msra.mxu0 0.0
    %51 = vmatprep.subr.mxu0 0.0
    %52 = vmatpush1.msra.mxu0 0.0
    %53 = vmatprep.subr.mxu0 0.0
    %54 = vmatpush1.msra.mxu0 0.0
    %55 = vmatprep.subr.mxu0 0.0
    %56 = vmatpush1.msra.mxu0 0.0
    %57 = vmatprep.subr.mxu0 0.0
    %58 = vmatpush1.msra.mxu0 0.0
    %59 = vmatprep.subr.mxu0 0.0
    %60 = vmatpush1.msra.mxu0 0.0
    %61 = vmatprep.subr.mxu0 0.0
    %62 = vmatpush1.msra.mxu0 0.0
    %63 = vmatprep.subr.mxu0 0.0
    %64 = vmatpush1.msra.mxu0 0.0
    %65 = vmatprep.subr.mxu0 0.0
    %66 = vmatpush1.msra.mxu0 0.0
    %67 = vmatprep.subr.mxu0 0.0
    %68 = vmatpush1.msra.mxu0 %v37
    %69 = vmatprep.subr.mxu0 0.0
    %70 = vmatpush1.msra.mxu0 %v22
    %71 = vmatprep.subr.mxu0 0.0
    %72 = vmatpush2.msra.mxu0 0.0
    %73 = vmatprep.subr.mxu0 0.0
    %74 = vmatpush2.msra.mxu0 0.0
    %75 = vmatprep.subr.mxu0 0.0
    %76 = vmatpush2.msra.mxu0 0.0
    %77 = vmatprep.subr.mxu0 0.0
    %78 = vmatpush2.msra.mxu0 0.0
    %79 = vmatprep.subr.mxu0 0.0
    %80 = vmatpush2.msra.mxu0 0.0
    %81 = vmatprep.subr.mxu0 0.0
    %82 = vmatpush2.msra.mxu0 0.0
    %83 = vmatprep.subr.mxu0 0.0
    %84 = vmatpush2.msra.mxu0 0.0
    %85 = vmatprep.subr.mxu0 0.0
    %86 = vmatpush2.msra.mxu0 0.0
    %87 = vmatprep.subr.mxu0 0.0
    %88 = vmatpush2.msra.mxu0 0.0
    %89 = vmatprep.subr.mxu0 0.0
    %90 = vmatpush2.msra.mxu0 0.0
    %91 = vmatprep.subr.mxu0 0.0
    %92 = vmatpush2.msra.mxu0 0.0
    %93 = vmatprep.subr.mxu0 0.0
    %94 = vmatpush2.msra.mxu0 0.0
    %95 = vmatprep.subr.mxu0 0.0
    %96 = vmatpush2.msra.mxu0 0.0
    %97 = vmatprep.subr.mxu0 0.0
    %98 = vmatpush2.msra.mxu0 0.0
    %99 = vmatprep.subr.mxu0 0.0
    %100 = vmatpush2.msra.mxu0 0.0
    %101 = vmatprep.subr.mxu0 0.0
    %102 = vmatpush2.msra.mxu0 0.0
    %103 = vmatprep.mubr.f32.mxu0 0.0
    %104 = vmatmul.mubr.f32.gmra.mxu0 %v33
    %v105 = vpop.f32.mrf.mxu0
    %v106 = vadd.f32 %v29, %v105
    %v107 = vpop.f32.mrf.mxu0
    %108 = vdwg.mxu0
    %v109 = vmax.f32 %v106, 0.0
    %v110 = vld [vmem:[%s3] sm:$0xff]
    %v111 = vld [vmem:[%s3 + $0x8] sm:$0xff]
    %v112 = vld [vmem:[%s3 + $0x10] sm:$0xff]
    %v113 = vld [vmem:[%s3 + $0x18] sm:$0xff]
    %v114 = vld [vmem:[%s3 + $0x20] sm:$0xff]
    %v115 = vld [vmem:[%s3 + $0x28] sm:$0xff]
    %v116 = vld [vmem:[%s3 + $0x30] sm:$0xff]
    %v117 = vld [vmem:[%s3 + $0x38] sm:$0xff]
    %v118 = vld [vmem:[%s3 + $0x40] sm:$0xff]
    %v119 = vld [vmem:[%s3 + $0x48] sm:$0xff]
    %v120 = vld [vmem:[%s3 + $0x50] sm:$0xff]
    %v121 = vld [vmem:[%s3 + $0x58] sm:$0xff]
    %v122 = vld [vmem:[%s3 + $0x60] sm:$0xff]
    %v123 = vld [vmem:[%s3 + $0x68] sm:$0xff]
    %v124 = vld [vmem:[%s3 + $0x70] sm:$0xff]
    %v125 = vld [vmem:[%s3 + $0x78] sm:$0xff]
    %v126 = vld [vmem:[%s4] sm:$0x1]
    %v128 = vlaneseq
    %v129 = vshrl.u32 %v128, 7
    %v130 = vsub.s32 0, %v129
    %v131 = vrot.slane %v126, %v130
    %133 = vmatprep.subr.mxu0 0.0
    %134 = vmatpush1.msra.mxu0 %v125
    %135 = vmatprep.subr.mxu0 0.0
    %136 = vmatpush1.msra.mxu0 %v124
    %137 = vmatprep.subr.mxu0 0.0
    %138 = vmatpush1.msra.mxu0 %v123
    %139 = vmatprep.subr.mxu0 0.0
    %140 = vmatpush1.msra.mxu0 %v122
    %141 = vmatprep.subr.mxu0 0.0
    %142 = vmatpush1.msra.mxu0 %v121
    %143 = vmatprep.subr.mxu0 0.0
    %144 = vmatpush1.msra.mxu0 %v120
    %145 = vmatprep.subr.mxu0 0.0
    %146 = vmatpush1.msra.mxu0 %v119
    %147 = vmatprep.subr.mxu0 0.0
    %148 = vmatpush1.msra.mxu0 %v118
    %149 = vmatprep.subr.mxu0 0.0
    %150 = vmatpush1.msra.mxu0 %v117
    %151 = vmatprep.subr.mxu0 0.0
    %152 = vmatpush1.msra.mxu0 %v116
    %153 = vmatprep.subr.mxu0 0.0
    %154 = vmatpush1.msra.mxu0 %v115
    %155 = vmatprep.subr.mxu0 0.0
    %156 = vmatpush1.msra.mxu0 %v114
    %157 = vmatprep.subr.mxu0 0.0
    %158 = vmatpush1.msra.mxu0 %v113
    %159 = vmatprep.subr.mxu0 0.0
    %160 = vmatpush1.msra.mxu0 %v112
    %161 = vmatprep.subr.mxu0 0.0
    %162 = vmatpush1.msra.mxu0 %v111
    %163 = vmatprep.subr.mxu0 0.0
    %164 = vmatpush1.msra.mxu0 %v110
    %165 = vmatprep.subr.mxu0 0.0
    %166 = vmatpush2.msra.mxu0 0.0
    %167 = vmatprep.subr.mxu0 0.0
    %168 = vmatpush2.msra.mxu0 0.0
    %169 = vmatprep.subr.mxu0 0.0
    %170 = vmatpush2.msra.mxu0 0.0
    %171 = vmatprep.subr.mxu0 0.0
    %172 = vmatpush2.msra.mxu0 0.0
    %173 = vmatprep.subr.mxu0 0.0
    %174 = vmatpush2.msra.mxu0 0.0
    %175 = vmatprep.subr.mxu0 0.0
    %176 = vmatpush2.msra.mxu0 0.0
    %177 = vmatprep.subr.mxu0 0.0
    %178 = vmatpush2.msra.mxu0 0.0
    %179 = vmatprep.subr.mxu0 0.0
    %180 = vmatpush2.msra.mxu0 0.0
    %181 = vmatprep.subr.mxu0 0.0
    %182 = vmatpush2.msra.mxu0 0.0
    %183 = vmatprep.subr.mxu0 0.0
    %184 = vmatpush2.msra.mxu0 0.0
    %185 = vmatprep.subr.mxu0 0.0
    %186 = vmatpush2.msra.mxu0 0.0
    %187 = vmatprep.subr.mxu0 0.0
    %188 = vmatpush2.msra.mxu0 0.0
    %189 = vmatprep.subr.mxu0 0.0
    %190 = vmatpush2.msra.mxu0 0.0
    %191 = vmatprep.subr.mxu0 0.0
    %192 = vmatpush2.msra.mxu0 0.0
    %193 = vmatprep.subr.mxu0 0.0
    %194 = vmatpush2.msra.mxu0 0.0
    %195 = vmatprep.subr.mxu0 0.0
    %196 = vmatpush2.msra.mxu0 0.0
    %197 = vmatprep.mubr.f32.mxu0 0.0
    %198 = vmatmul.mubr.f32.gmra.mxu0 %v109
    %v199 = vpop.f32.mrf.mxu0
    %v200 = vadd.f32 %v131, %v199
    %v201 = vpop.f32.mrf.mxu0
    %202 = vdwg.mxu0
    %v203 = vxor.u32 %v200, 2147483648
    %v204 = vmul.f32 %v203, 1.442695
    %v205 = vpow.pop %v204
    %v206 = vadd.f32 %v205, 1.0
    %v207 = vrcp.pop %v206
    %v208 = vmul.f32 1.0, %v207
    %v209 = vlaneseq
    %v210 = vand.u32 %v209, 127
    %vm211 = vcmp.lt.s32.totalorder %v210, 5
    %v212 = vmul.f32 %v208, 1.442695
    %v213 = vpow.pop %v212
    %v214 = vsel %vm211, %v213, 0.0
    %vm215 = vcmask 64512
    %v216 = vsel %vm215, %v214, 0.0
    %217 = vadd.xlane.f32.xlu0 %v216
    %v218 = vpop.xlane.xlu0 %217
    %v219 = vrcp.pop %v218
    %v220 = vmul.f32 %v218, %v219
    %v221 = vsub.f32 2.0, %v220
    %v222 = vmul.f32 %v219, %v221
    %v223 = vmul.f32 %v214, %v222
    %224 = vst.msk [vmem:[#allocation2] sm:$0xff] %vm215, %v223
    // Predicated region
    $region22: #{policy_net_forward.1} parent=1 // pred_check
      _
    $region23: #{policy_net_forward.1} parent=1 // pred_check_branch
      %226 = sbr.rel (0) target = $region25
    $region24: #{policy_net_forward.1} parent=1 // pred_region
      %s228 = ssub.s32 128, 128
      %229 = vsyncadd [#allocation3], %s228
      %s231 = sshll.u32 [#allocation2], 4
      %s232 = int_to_ptr.vmem [resolvable:$true] %s231
      %234 = dma.vmem_to_hbm [thread:$0]  %s232, 128, %s5, [#allocation3]
    $region25: #{policy_net_forward.1} parent=1 // pred_fallthru
      _
    // Predicated region
    $region26: #{policy_net_forward.1} parent=1 // pred_check
      _
    $region27: #{policy_net_forward.1} parent=1 // pred_check_branch
      %236 = sbr.rel (0) target = $region29
    $region28: #{policy_net_forward.1} parent=1 // pred_region
      %237 = dma.done [#allocation3], 128
    $region29: #{policy_net_forward.1} parent=1 // pred_fallthru
      _
    %238 = vsyncpa [#allocation3], 1

</llo_original>
